<compile_context>
chip_gen: v7x
topology: tpu7x:2x2x1
jax: 0.10.0
libtpu: 0.0.40
codegen_flags: <defaults>
</compile_context>

<pallas_src>
import jax
import jax.numpy as jnp
from jax.experimental import pallas as pl
from jax.experimental.pallas import tpu as pltpu

TIME_STEPS = 20


# ----------------------------------------------------------------------------
# Parameter / schedule setup (plain-JAX glue, mirrors nn.Module.__init__)
# ----------------------------------------------------------------------------
def cosine_schedule(time_steps: int) -> jnp.ndarray:
    steps = jnp.arange(time_steps + 1, dtype=jnp.float32)
    alpha_bar = jnp.cos((steps / time_steps + 0.008) / 1.008 * jnp.pi / 2.0) ** 2
    alpha_bar = alpha_bar / alpha_bar[0]
    return alpha_bar


def noise_scale_for(noise_weights: jnp.ndarray, component_type: str) -> jnp.ndarray:
    w = jax.nn.softmax(noise_weights, axis=0)
    if component_type == "trend":
        return w[0] * 0.5
    elif component_type == "seasonal":
        return w[1] * 1.0
    else:
        return w[2] * 1.5


# ----------------------------------------------------------------------------
# Pallas kernel: pure streaming elementwise  o = a * x + b * n
#   a_ref / b_ref : (1, SF)  f32  per-(seq,feature) sqrt factors, broadcast over rows
#   x_ref / n_ref : (TB, SF) native dtype
# ----------------------------------------------------------------------------
def diffusion_kernel(a_ref, b_ref, x_ref, n_ref, o_ref):
    a = a_ref[...]
    b = b_ref[...]
    o_ref[...] = (a * x_ref[...] + b * n_ref[...]).astype(o_ref.dtype)


def _pick_row_tile(batch: int, row_bytes: int, target_bytes: int = 1 << 20) -> int:
    """Pick a batch-row tile so each input block is ~1 MiB (or the whole batch)."""
    if batch <= 8 or batch * row_bytes <= 2 * target_bytes:
        return batch                      # whole batch fits in a couple of blocks
    tb = max(8, (target_bytes // max(row_bytes, 1)) // 8 * 8)   # multiple of 8 rows
    return int(min(tb, (batch // 8) * 8))


def enhanced_diffusion(x, noise, t, alpha_schedule, noise_scale):
    B, S, F = x.shape
    SF = S * F

    # ---- hoisted prologue (O(S) work, done once instead of once per grid step) ----
    alpha_bar_t = alpha_schedule[t].astype(jnp.float32)                 # (S,)
    s = noise_scale.astype(jnp.float32)
    eff = jnp.clip(alpha_bar_t * s + (1.0 - s) * 0.8, 0.1, 0.99)        # (S,)
    a_row = jnp.repeat(jnp.sqrt(eff), F).reshape(1, SF)                 # (1, S*F) f32
    b_row = jnp.repeat(jnp.sqrt(1.0 - eff), F).reshape(1, SF)           # (1, S*F) f32

    # ---- lane-dense flatten (free row-major reshape) ----
    x2 = x.reshape(B, SF)
    n2 = noise.reshape(B, SF)

    tb = _pick_row_tile(B, SF * x.dtype.itemsize)
    grid = (pl.cdiv(B, tb),)

    out = pl.pallas_call(
        diffusion_kernel,
        out_shape=jax.ShapeDtypeStruct((B, SF), x.dtype),
        grid_spec=pltpu.PrefetchScalarGridSpec(
            num_scalar_prefetch=0,
            grid=grid,
            in_specs=[
                pl.BlockSpec((1, SF), lambda i: (0, 0)),     # sqrt(eff_alpha)
                pl.BlockSpec((1, SF), lambda i: (0, 0)),     # sqrt(1 - eff_alpha)
                pl.BlockSpec((tb, SF), lambda i: (i, 0)),    # x
                pl.BlockSpec((tb, SF), lambda i: (i, 0)),    # noise
            ],
            out_specs=pl.BlockSpec((tb, SF), lambda i: (i, 0)),
        ),
        compiler_params=pltpu.CompilerParams(dimension_semantics=("parallel",)),
    )(a_row, b_row, x2, n2)
    return out.reshape(B, S, F)


# ----------------------------------------------------------------------------
# Module-level forward (training mode, apply_noise=True, cosine scheduler)
# ----------------------------------------------------------------------------
def adaptive_diffusion_forward(x, noise_weights, alpha_schedule, key,
                               component_type="seasonal", apply_noise=True,
                               training=True):
    if not apply_noise or not training:
        return (x, None, None)
    B, S, F = x.shape
    k_t, k_n = jax.random.split(key)
    t = jax.random.randint(k_t, (S,), 0, TIME_STEPS)
    # TODO(synk): noise could be drawn in-kernel (pltpu.prng_seed + stateful draws)
    # to save one full HBM pass; kept jax.random.normal so the returned `noise`
    # exactly matches the host RNG reference.
    noise = jax.random.normal(k_n, x.shape, dtype=x.dtype)
    s = noise_scale_for(noise_weights, component_type)
    x_noisy = enhanced_diffusion(x, noise, t, alpha_schedule, s)
    return (x_noisy, noise, t)


if __name__ == "__main__":
    B, S, F = 2, 8, 32
    key = jax.random.PRNGKey(0)
    k_x, k_fwd = jax.random.split(key)

    x = jax.random.normal(k_x, (B, S, F), dtype=jnp.float32)
    noise_weights = jnp.ones((3,), dtype=jnp.float32)          # nn.Parameter(torch.ones(3))
    alpha_schedule = cosine_schedule(TIME_STEPS)

    x_noisy, noise, t = adaptive_diffusion_forward(
        x, noise_weights, alpha_schedule, k_fwd,
        component_type="seasonal", apply_noise=True, training=True)
    jax.block_until_ready(x_noisy)

    # reference check (pure JAX)
    s = noise_scale_for(noise_weights, "seasonal")
    ab = alpha_schedule[t].reshape(1, S, 1)
    eff = jnp.clip(ab * s + (1.0 - s) * 0.8, 0.1, 0.99)
    ref = jnp.sqrt(eff) * x + jnp.sqrt(1.0 - eff) * noise
    assert jnp.allclose(x_noisy, ref, atol=1e-5, rtol=1e-5)

    print("KERNEL_OK")
</pallas_src>

<mosaic_0001>
module attributes {stable_mosaic.version = 11 : i64} {
  func.func @diffusion_kernel(%arg0: i32, %arg1: memref<1x256xf32, #tpu.memory_space<vmem>>, %arg2: memref<1x256xf32, #tpu.memory_space<vmem>>, %arg3: memref<2x256xf32, #tpu.memory_space<vmem>>, %arg4: memref<2x256xf32, #tpu.memory_space<vmem>>, %arg5: memref<2x256xf32, #tpu.memory_space<vmem>>) attributes {dimension_semantics = [#tpu.dimension_semantics<parallel>], iteration_bounds = array<i64: 1>, scalar_prefetch = 0 : i64, scratch_operands = 0 : i64, tpu.core_type = #tpu.core_type<tc>, window_params = [{pipeline_mode = #tpu.pipeline_mode<synchronous>, transform_indices = @transform_0, window_bounds = array<i64: 1, 256>}, {pipeline_mode = #tpu.pipeline_mode<synchronous>, transform_indices = @transform_1, window_bounds = array<i64: 1, 256>}, {transform_indices = @transform_2, window_bounds = array<i64: 2, 256>}, {transform_indices = @transform_3, window_bounds = array<i64: 2, 256>}, {transform_indices = @transform_4, window_bounds = array<i64: 2, 256>}]} {
    %c0 = arith.constant 0 : index
    %c0_0 = arith.constant 0 : index
    %0 = vector.load %arg1[%c0, %c0_0] : memref<1x256xf32, #tpu.memory_space<vmem>>, vector<1x256xf32>
    %c0_1 = arith.constant 0 : index
    %c0_2 = arith.constant 0 : index
    %1 = vector.load %arg2[%c0_1, %c0_2] : memref<1x256xf32, #tpu.memory_space<vmem>>, vector<1x256xf32>
    %c0_3 = arith.constant 0 : index
    %c0_4 = arith.constant 0 : index
    %2 = vector.load %arg3[%c0_3, %c0_4] : memref<2x256xf32, #tpu.memory_space<vmem>>, vector<2x256xf32>
    %3 = vector.broadcast %0 : vector<1x256xf32> to vector<2x256xf32>
    %4 = arith.mulf %3, %2 : vector<2x256xf32>
    %c0_5 = arith.constant 0 : index
    %c0_6 = arith.constant 0 : index
    %5 = vector.load %arg4[%c0_5, %c0_6] : memref<2x256xf32, #tpu.memory_space<vmem>>, vector<2x256xf32>
    %6 = vector.broadcast %1 : vector<1x256xf32> to vector<2x256xf32>
    %7 = arith.mulf %6, %5 : vector<2x256xf32>
    %8 = arith.addf %4, %7 : vector<2x256xf32>
    %c0_7 = arith.constant 0 : index
    %c0_8 = arith.constant 0 : index
    %9 = vector.load %arg5[%c0_7, %c0_8] : memref<2x256xf32, #tpu.memory_space<vmem>>, vector<2x256xf32>
    tpu.vector_store %arg5[%c0_7, %c0_8], %8 {strides = array<i32>} : memref<2x256xf32, #tpu.memory_space<vmem>>, vector<2x256xf32>,
    return
  }
  func.func @transform_0(%arg0: i32) -> (i32, i32) {
    %c0_i32 = arith.constant 0 : i32
    %c0_i32_0 = arith.constant 0 : i32
    %c0_i32_1 = arith.constant 0 : i32
    return %c0_i32, %c0_i32_0 : i32, i32
  }
  func.func @transform_1(%arg0: i32) -> (i32, i32) {
    %c0_i32 = arith.constant 0 : i32
    %c0_i32_0 = arith.constant 0 : i32
    %c0_i32_1 = arith.constant 0 : i32
    return %c0_i32, %c0_i32_0 : i32, i32
  }
  func.func @transform_2(%arg0: i32) -> (i32, i32) {
    %c0_i32 = arith.constant 0 : i32
    %c0_i32_0 = arith.constant 0 : i32
    return %arg0, %c0_i32 : i32, i32
  }
  func.func @transform_3(%arg0: i32) -> (i32, i32) {
    %c0_i32 = arith.constant 0 : i32
    %c0_i32_0 = arith.constant 0 : i32
    return %arg0, %c0_i32 : i32, i32
  }
  func.func @transform_4(%arg0: i32) -> (i32, i32) {
    %c0_i32 = arith.constant 0 : i32
    %c0_i32_0 = arith.constant 0 : i32
    return %arg0, %c0_i32 : i32, i32
  }
}

</mosaic_0001>

<llo_original>
// kernel: tpu_custom_call.1
$region0: #{tpu_custom_call.1}
  #allocation0 [shape = 'u32[]', space=smem, size = 0x4, offset = 0x4, fixed_abs, tag = 'smem constant byte address 0x4 - core index']
  #allocation1 [shape = 'u32[144,128]{1,0:T(1,128)}', space=vmem, size = 0x12000, scoped, tag = 'internal scratch']
  %s0 = inlined_call_operand.hbm [shape: f32[1,256], index: 0, kind: input, shape index: {}]
  %s1 = inlined_call_operand.vmem [shape: f32[1,256], index: 1, kind: input, shape index: {}]
  %s2 = inlined_call_operand.vmem [shape: f32[2,256], index: 2, kind: input, shape index: {}]
  %s3 = inlined_call_operand.vmem [shape: f32[2,256], index: 3, kind: input, shape index: {}]
  %s4 = inlined_call_operand.hbm [shape: f32[2,256], index: 4, kind: output, shape index: {}]
  %s5 = sld [smem:[#allocation0]]
  $region30: #{tpu_custom_call.1} parent=0
    _
  %s7 = ssub.s32 1, %s5
  %s8 = scalar_select 0, %s7, %s5
  $region1: #{tpu_custom_call.1} parent=0
    #allocation2 [shape = 'u8[1024]{0}', space=vmem, size = 0x400, scoped, tag = 'input window, operand 0, single buffered']
    #allocation3 [shape = 's32[1]{0}', space=sflag, size = 0x4, scoped, tag = 'scoped memory for tpu_custom_call.1']
    #allocation4 [shape = 's32[1]{0}', space=sflag, size = 0x4, scoped, tag = 'scoped memory for tpu_custom_call.1']
    #allocation5 [shape = 'u8[2048]{0}', space=vmem, size = 0x800, scoped, tag = 'output window, operand 0, single buffered']
    %9 = vsyncpa [#allocation3], 0
    %10 = vsyncpa [#allocation4], 0
    // Predicated region
    $region2: #{tpu_custom_call.1} parent=1 // pred_check
      _
    $region3: #{tpu_custom_call.1} parent=1 // pred_check_branch
      %12 = sbr.rel (0) target = $region5
    $region4: #{tpu_custom_call.1} parent=1 // pred_region
      %s14 = ssub.s32 32, 32
      %15 = vsyncadd [#allocation3], %s14
      %s17 = sshll.u32 [#allocation2], 4
      %s18 = int_to_ptr.vmem [resolvable:$true] %s17
      %20 = dma.hbm_to_vmem [thread:$0]  %s0, 32, %s18, [#allocation3]
    $region5: #{tpu_custom_call.1} parent=1 // pred_fallthru
      _
    // Predicated region
    $region6: #{tpu_custom_call.1} parent=1 // pred_check
      _
    $region7: #{tpu_custom_call.1} parent=1 // pred_check_branch
      %22 = sbr.rel (0) target = $region9
    $region8: #{tpu_custom_call.1} parent=1 // pred_region
      _
    $region9: #{tpu_custom_call.1} parent=1 // pred_fallthru
      _
    // Predicated region
    $region10: #{tpu_custom_call.1} parent=1 // pred_check
      _
    $region11: #{tpu_custom_call.1} parent=1 // pred_check_branch
      %24 = sbr.rel (0) target = $region13
    $region12: #{tpu_custom_call.1} parent=1 // pred_region
      _
    $region13: #{tpu_custom_call.1} parent=1 // pred_fallthru
      _
    // Predicated region
    $region14: #{tpu_custom_call.1} parent=1 // pred_check
      _
    $region15: #{tpu_custom_call.1} parent=1 // pred_check_branch
      %26 = sbr.rel (0) target = $region17
    $region16: #{tpu_custom_call.1} parent=1 // pred_region
      _
    $region17: #{tpu_custom_call.1} parent=1 // pred_fallthru
      _
    // Predicated region
    $region18: #{tpu_custom_call.1} parent=1 // pred_check
      _
    $region19: #{tpu_custom_call.1} parent=1 // pred_check_branch
      %28 = sbr.rel (0) target = $region21
    $region20: #{tpu_custom_call.1} parent=1 // pred_region
      %29 = dma.done [#allocation3], 32
    $region21: #{tpu_custom_call.1} parent=1 // pred_fallthru
      _
    %v30 = vld [vmem:[#allocation2] sm:$0x3]
    %v31 = vld [vmem:[%s1] sm:$0x3]
    %v32 = vld [vmem:[%s2] sm:$0xf]
    %v34 = vlaneseq
    %v35 = vshrl.u32 %v34, 7
    %v36 = vsub.s32 0, %v35
    %v37 = vrot.slane %v30, %v36
    %v38 = vlaneseq
    %v39 = vshrl.u32 %v38, 7
    %v40 = vsub.s32 1, %v39
    %v41 = vrot.slane %v30, %v40
    %v46 = vunpack.c.l.s4 1983009808
    %v47 = vunpack.c.0.s8 %v46
    %v48 = vlaneseq
    %v49 = vshrl.u32 %v48, 7
    %v50 = vsub.s32 %v47, %v49
    %v51 = vrot.slane %v32, %v50
    %v52 = vcombine.high %v51, %v51
    %v55 = vmul.f32 %v37, %v51
    %v56 = vmul.f32 %v41, %v52
    %v57 = vld [vmem:[%s3] sm:$0xf]
    %v59 = vlaneseq
    %v60 = vshrl.u32 %v59, 7
    %v61 = vsub.s32 0, %v60
    %v62 = vrot.slane %v31, %v61
    %v63 = vlaneseq
    %v64 = vshrl.u32 %v63, 7
    %v65 = vsub.s32 1, %v64
    %v66 = vrot.slane %v31, %v65
    %v71 = vunpack.c.l.s4 1983009808
    %v72 = vunpack.c.0.s8 %v71
    %v73 = vlaneseq
    %v74 = vshrl.u32 %v73, 7
    %v75 = vsub.s32 %v72, %v74
    %v76 = vrot.slane %v57, %v75
    %v77 = vcombine.high %v76, %v76
    %v80 = vmul.f32 %v62, %v76
    %v81 = vmul.f32 %v66, %v77
    %v82 = vadd.f32 %v55, %v80
    %v83 = vadd.f32 %v56, %v81
    %v86 = vcombine.low %v82, %v83
    %v88 = vunpack.c.l.s4 1983009808
    %v89 = vunpack.c.0.s8 %v88
    %v90 = vlaneseq
    %v91 = vshrl.u32 %v90, 7
    %v92 = vsub.s32 %v89, %v91
    %v93 = vrot.slane %v86, %v92
    %95 = vst [vmem:[#allocation5] sm:$0xf] %v93
    // Predicated region
    $region22: #{tpu_custom_call.1} parent=1 // pred_check
      _
    $region23: #{tpu_custom_call.1} parent=1 // pred_check_branch
      %97 = sbr.rel (0) target = $region25
    $region24: #{tpu_custom_call.1} parent=1 // pred_region
      %s99 = ssub.s32 64, 64
      %100 = vsyncadd [#allocation4], %s99
      %s102 = sshll.u32 [#allocation5], 4
      %s103 = int_to_ptr.vmem [resolvable:$true] %s102
      %105 = dma.vmem_to_hbm [thread:$0]  %s103, 64, %s4, [#allocation4]
    $region25: #{tpu_custom_call.1} parent=1 // pred_fallthru
      _
    // Predicated region
    $region26: #{tpu_custom_call.1} parent=1 // pred_check
      _
    $region27: #{tpu_custom_call.1} parent=1 // pred_check_branch
      %107 = sbr.rel (0) target = $region29
    $region28: #{tpu_custom_call.1} parent=1 // pred_region
      %108 = dma.done [#allocation4], 64
    $region29: #{tpu_custom_call.1} parent=1 // pred_fallthru
      _
    %109 = vsyncpa [#allocation3], 1
    %110 = vsyncpa [#allocation4], 1

</llo_original>
